<compile_context>
chip_gen: v7x
topology: tpu7x:2x2x1
jax: 0.10.0
libtpu: 0.0.40
codegen_flags: <defaults>
</compile_context>

<pallas_src>
import jax
import jax.numpy as jnp
from jax.experimental import pallas as pl
from jax.experimental.pallas import tpu as pltpu


def _round_up(n, m):
    return ((n + m - 1) // m) * m


# ----------------------------------------------------------------------------
# Parameter init (matches torch Linear shapes, transposed) and one-time fusing
# ----------------------------------------------------------------------------
def init_params(key, input_size, hidden_size, output_size):
    D = input_size + hidden_size
    keys = jax.random.split(key, 8)

    def lin(kw, kb, fan_in, fan_out):
        bound = 1.0 / jnp.sqrt(fan_in)
        w = jax.random.uniform(kw, (fan_in, fan_out), jnp.float32, -bound, bound)
        b = jax.random.uniform(kb, (1, fan_out), jnp.float32, -bound, bound)
        return w, b

    w1, b1 = lin(keys[0], keys[1], D, D)
    w2, b2 = lin(keys[2], keys[3], D, D)
    wo, bo = lin(keys[4], keys[5], D, output_size)
    wh, bh = lin(keys[6], keys[7], D, hidden_size)
    return (w1, b1, w2, b2, wo, bo, wh, bh)


def fuse_params(params, input_size, hidden_size, output_size,
                weight_dtype=jnp.bfloat16, lane=128):
    """One-time preprocessing (outside the hot path).

    Packs everything into:
      * w_slab (IB + 3P, P): rows [0,I)      = w1x  (cols 0:D)
                             rows [r1,r1+P)  = w1h embedded at rows r1+O..r1+O+H
                                               so `state @ band == hidden @ w1h`
                             rows [r2,r2+P)  = w2   (rows/cols 0:D)
                             rows [r3,r3+P)  = fused head [wo | wh | 0]
      * b_slab (8, P) f32:   row 0 = b1, row 1 = b2, row 2 = [bo | bh | 0]
    All band starts are multiples of 16 (bf16 sublane tile), all widths = P
    (multiple of 128 lanes) so every in-kernel slice is tile-aligned and every
    store is lane-dense.
    """
    w1, b1, w2, b2, wo, bo, wh, bh = params
    I, H, O = input_size, hidden_size, output_size
    D = I + H
    P = max(_round_up(D, lane), _round_up(O + H, lane))
    IB = _round_up(I, 16)
    r1, r2, r3 = IB, IB + P, IB + 2 * P

    w_slab = jnp.zeros((IB + 3 * P, P), jnp.float32)
    w_slab = w_slab.at[0:I, 0:D].set(w1[:I, :])                    # w1x
    w_slab = w_slab.at[r1 + O:r1 + O + H, 0:D].set(w1[I:, :])      # w1h (state rows)
    w_slab = w_slab.at[r2:r2 + D, 0:D].set(w2)                     # w2
    w_slab = w_slab.at[r3:r3 + D, 0:O].set(wo)                     # head: output cols
    w_slab = w_slab.at[r3:r3 + D, O:O + H].set(wh)                 # head: hidden cols
    w_slab = w_slab.astype(weight_dtype)

    b_slab = jnp.zeros((8, P), jnp.float32)
    b_slab = b_slab.at[0, 0:D].set(b1[0])
    b_slab = b_slab.at[1, 0:D].set(b2[0])
    b_slab = b_slab.at[2, 0:O].set(bo[0])
    b_slab = b_slab.at[2, O:O + H].set(bh[0])

    return dict(w_slab=w_slab, b_slab=b_slab,
                input_size=I, hidden_size=H, output_size=O,
                P=P, r1=r1, r2=r2, r3=r3)


# ----------------------------------------------------------------------------
# Kernel
# ----------------------------------------------------------------------------
def _make_rnn_kernel(I, P, r1, r2, r3):
    def kernel(x_ref, w_ref, b_ref, h0_ref, out_ref, state_ref):
        # t == 0: load the initial hidden state (already embedded in a (B,P)
        # slab at the hidden columns) into the carried VMEM state.
        @pl.when(pl.program_id(0) == 0)
        def _():
            state_ref[...] = h0_ref[...]

        def mm(a, w):  # MXU matmul, f32 accumulation regardless of weight dtype
            return jnp.dot(a.astype(w.dtype), w, preferred_element_type=jnp.float32)

        # Static, tile-aligned row slices of the VMEM-resident weight slab.
        w1x = w_ref[0:I, :]
        w1h = w_ref[r1:r1 + P, :]
        w2 = w_ref[r2:r2 + P, :]
        who = w_ref[r3:r3 + P, :]
        biases = b_ref[...]
        b1 = biases[0:1, :]
        b2 = biases[1:2, :]
        bho = biases[2:3, :]

        x = x_ref[0]                                      # (B, I) for step t
        # layer 1: relu(cat(x, h_prev) @ w1 + b1) with the concat folded into
        # split weights; the carried state slab feeds w1h_big directly (its
        # output/zero columns hit zero rows, so no slicing of the state).
        h = jnp.maximum(mm(x, w1x) + mm(state_ref[...], w1h) + b1, 0.0)
        # layer 2: relu(h @ w2 + b2)
        h = jnp.maximum(mm(h, w2) + b2, 0.0)
        # fused heads: one lane-dense (B, P) slab = [output | hidden | 0]
        slab = mm(h, who) + bho
        state_ref[...] = slab                             # carry to step t+1
        out_ref[0] = slab.astype(out_ref.dtype)           # single wide store
    return kernel


# ----------------------------------------------------------------------------
# Wrappers
# ----------------------------------------------------------------------------
def rnn_forward_seq(x_seq, h0, fused):
    """Run the RNN cell over a whole sequence in ONE pallas_call.

    x_seq: (T, B, input_size) f32, h0: (B, hidden_size) f32.
    Returns (outputs (T,B,O), hiddens (T,B,H));  hiddens[-1] is the final state.
    """
    T, B, I = x_seq.shape
    P, H, O = fused["P"], fused["hidden_size"], fused["output_size"]
    w_slab, b_slab = fused["w_slab"], fused["b_slab"]

    # Once per sequence (not per step): embed h0 into the state-slab layout.
    h0_slab = jnp.zeros((B, P), jnp.float32).at[:, O:O + H].set(h0.astype(jnp.float32))

    kernel = _make_rnn_kernel(I, P, fused["r1"], fused["r2"], fused["r3"])

    slab = pl.pallas_call(
        kernel,
        out_shape=jax.ShapeDtypeStruct((T, B, P), jnp.float32),
        grid=(T,),
        in_specs=[
            pl.BlockSpec((1, B, I), lambda t: (t, 0, 0)),      # x_t   (per-step DMA)
            pl.BlockSpec(w_slab.shape, lambda t: (0, 0)),      # weights (resident)
            pl.BlockSpec(b_slab.shape, lambda t: (0, 0)),      # biases  (resident)
            pl.BlockSpec((B, P), lambda t: (0, 0)),            # h0 slab (resident)
        ],
        out_specs=pl.BlockSpec((1, B, P), lambda t: (t, 0, 0)),
        scratch_shapes=[pltpu.VMEM((B, P), jnp.float32)],      # carried hidden state
        compiler_params=pltpu.CompilerParams(
            dimension_semantics=("arbitrary",)),               # recurrence over T
    )(x_seq, w_slab, b_slab, h0_slab)

    return slab[:, :, :O], slab[:, :, O:O + H]


def rnn_forward(x, hidden_state, fused):
    """Single step — exact semantics of torch RNN.forward(x, hidden_state)."""
    outs, hids = rnn_forward_seq(x[None], hidden_state, fused)
    return outs[0], hids[0]


def initiate_hidden_state(batch_size, hidden_size):
    return jnp.zeros((batch_size, hidden_size), jnp.float32)


# ----------------------------------------------------------------------------
# Pure-JAX reference (original, un-fused formulation)
# ----------------------------------------------------------------------------
def reference_step(params, x, h):
    w1, b1, w2, b2, wo, bo, wh, bh = params
    xh = jnp.concatenate([x, h], axis=1)
    a = jnp.maximum(xh @ w1 + b1, 0.0)
    a = jnp.maximum(a @ w2 + b2, 0.0)
    return a @ wo + bo, a @ wh + bh


def reference_seq(params, x_seq, h0):
    def step(h, x):
        out, h_new = reference_step(params, x, h)
        return h_new, (out, h_new)
    _, (outs, hids) = jax.lax.scan(step, h0, x_seq)
    return outs, hids


if __name__ == "__main__":
    input_size, hidden_size, output_size = 16, 32, 8
    batch, seq_len = 4, 8

    key = jax.random.PRNGKey(0)
    k_params, k_x = jax.random.split(key)
    params = init_params(k_params, input_size, hidden_size, output_size)
    x_seq = jax.random.normal(k_x, (seq_len, batch, input_size), dtype=jnp.float32)
    h0 = initiate_hidden_state(batch, hidden_size)

    fused_f32 = fuse_params(params, input_size, hidden_size, output_size,
                            weight_dtype=jnp.float32)
    fused_bf16 = fuse_params(params, input_size, hidden_size, output_size,
                             weight_dtype=jnp.bfloat16)

    # 1) single step (== torch forward), f32 weights, tight tolerance
    out1, hid1 = rnn_forward(x_seq[0], h0, fused_f32)
    jax.block_until_ready((out1, hid1))
    ref_out1, ref_hid1 = reference_step(params, x_seq[0], h0)
    assert out1.shape == (batch, output_size) and hid1.shape == (batch, hidden_size)
    assert jnp.allclose(out1, ref_out1, atol=1e-4), "single-step output mismatch"
    assert jnp.allclose(hid1, ref_hid1, atol=1e-4), "single-step hidden mismatch"

    # 2) full sequence with the recurrence inside the kernel, f32 weights
    outs, hids = rnn_forward_seq(x_seq, h0, fused_f32)
    jax.block_until_ready((outs, hids))
    ref_outs, ref_hids = reference_seq(params, x_seq, h0)
    assert jnp.allclose(outs, ref_outs, atol=1e-4), "sequence output mismatch (f32)"
    assert jnp.allclose(hids, ref_hids, atol=1e-4), "sequence hidden mismatch (f32)"

    # 3) full sequence with bf16 weights (MXU-native), f32 accumulation
    outs_b, hids_b = rnn_forward_seq(x_seq, h0, fused_bf16)
    jax.block_until_ready((outs_b, hids_b))
    assert jnp.allclose(outs_b, ref_outs, atol=2e-2, rtol=2e-2), "sequence output mismatch (bf16)"
    assert jnp.allclose(hids_b, ref_hids, atol=2e-2, rtol=2e-2), "sequence hidden mismatch (bf16)"

    print("KERNEL_OK")
</pallas_src>

<mosaic_0001>
module attributes {stable_mosaic.version = 11 : i64} {
  func.func @kernel(%arg0: i32, %arg1: memref<1x4x16xf32, #tpu.memory_space<vmem>>, %arg2: memref<400x128xf32, #tpu.memory_space<vmem>>, %arg3: memref<8x128xf32, #tpu.memory_space<vmem>>, %arg4: memref<4x128xf32, #tpu.memory_space<vmem>>, %arg5: memref<1x4x128xf32, #tpu.memory_space<vmem>>, %arg6: memref<4x128xf32, #tpu.memory_space<vmem>>) attributes {dimension_semantics = [#tpu.dimension_semantics<arbitrary>], iteration_bounds = array<i64: 1>, scalar_prefetch = 0 : i64, scratch_operands = 1 : i64, tpu.core_type = #tpu.core_type<tc>, window_params = [{transform_indices = @transform_0, window_bounds = array<i64: 1, 4, 16>}, {pipeline_mode = #tpu.pipeline_mode<synchronous>, transform_indices = @transform_1, window_bounds = array<i64: 400, 128>}, {pipeline_mode = #tpu.pipeline_mode<synchronous>, transform_indices = @transform_2, window_bounds = array<i64: 8, 128>}, {pipeline_mode = #tpu.pipeline_mode<synchronous>, transform_indices = @transform_3, window_bounds = array<i64: 4, 128>}, {transform_indices = @transform_4, window_bounds = array<i64: 1, 4, 128>}]} {
    %c0_i32 = arith.constant 0 : i32
    %0 = arith.cmpi eq, %arg0, %c0_i32 : i32
    %1 = arith.extui %0 : i1 to i32
    %c0_i32_0 = arith.constant 0 : i32
    %2 = arith.cmpi ne, %1, %c0_i32_0 : i32
    scf.if %2 {
      %c0_22 = arith.constant 0 : index
      %c0_23 = arith.constant 0 : index
      %33 = vector.load %arg4[%c0_22, %c0_23] : memref<4x128xf32, #tpu.memory_space<vmem>>, vector<4x128xf32>
      %c0_24 = arith.constant 0 : index
      %c0_25 = arith.constant 0 : index
      %34 = vector.load %arg6[%c0_24, %c0_25] : memref<4x128xf32, #tpu.memory_space<vmem>>, vector<4x128xf32>
      tpu.vector_store %arg6[%c0_24, %c0_25], %33 {strides = array<i32>} : memref<4x128xf32, #tpu.memory_space<vmem>>, vector<4x128xf32>,
    } else {
    }
    %c0 = arith.constant 0 : index
    %c0_1 = arith.constant 0 : index
    %3 = vector.load %arg2[%c0, %c0_1] : memref<400x128xf32, #tpu.memory_space<vmem>>, vector<16x128xf32>
    %c16 = arith.constant 16 : index
    %c0_2 = arith.constant 0 : index
    %4 = vector.load %arg2[%c16, %c0_2] : memref<400x128xf32, #tpu.memory_space<vmem>>, vector<128x128xf32>
    %c144 = arith.constant 144 : index
    %c0_3 = arith.constant 0 : index
    %5 = vector.load %arg2[%c144, %c0_3] : memref<400x128xf32, #tpu.memory_space<vmem>>, vector<128x128xf32>
    %c272 = arith.constant 272 : index
    %c0_4 = arith.constant 0 : index
    %6 = vector.load %arg2[%c272, %c0_4] : memref<400x128xf32, #tpu.memory_space<vmem>>, vector<128x128xf32>
    %c0_5 = arith.constant 0 : index
    %c0_6 = arith.constant 0 : index
    %7 = vector.load %arg3[%c0_5, %c0_6] : memref<8x128xf32, #tpu.memory_space<vmem>>, vector<8x128xf32>
    %8 = vector.extract_strided_slice %7 {offsets = [0, 0], sizes = [1, 128], strides = [1, 1]} : vector<8x128xf32> to vector<1x128xf32>
    %9 = vector.extract_strided_slice %7 {offsets = [1, 0], sizes = [1, 128], strides = [1, 1]} : vector<8x128xf32> to vector<1x128xf32>
    %10 = vector.extract_strided_slice %7 {offsets = [2, 0], sizes = [1, 128], strides = [1, 1]} : vector<8x128xf32> to vector<1x128xf32>
    %c0_7 = arith.constant 0 : index
    %c0_8 = arith.constant 0 : index
    %c0_9 = arith.constant 0 : index
    %11 = vector.load %arg1[%c0_7, %c0_8, %c0_9] : memref<1x4x16xf32, #tpu.memory_space<vmem>>, vector<1x4x16xf32>
    %12 = vector.shape_cast %11 : vector<1x4x16xf32> to vector<4x16xf32>
    %cst = arith.constant dense<0.000000e+00> : vector<4x128xf32>
    %13 = tpu.matmul %12, %3, %cst {dimension_numbers = #tpu.dot_dimension_numbers<[1], [0], [0], [1], [0, 0, 1, 1], [], []>} : vector<4x16xf32>, vector<16x128xf32>, vector<4x128xf32> -> vector<4x128xf32>
    %c0_10 = arith.constant 0 : index
    %c0_11 = arith.constant 0 : index
    %14 = vector.load %arg6[%c0_10, %c0_11] : memref<4x128xf32, #tpu.memory_space<vmem>>, vector<4x128xf32>
    %cst_12 = arith.constant dense<0.000000e+00> : vector<4x128xf32>
    %15 = tpu.matmul %14, %4, %cst_12 {dimension_numbers = #tpu.dot_dimension_numbers<[1], [0], [0], [1], [0, 0, 1, 1], [], []>} : vector<4x128xf32>, vector<128x128xf32>, vector<4x128xf32> -> vector<4x128xf32>
    %16 = arith.addf %13, %15 : vector<4x128xf32>
    %17 = vector.broadcast %8 : vector<1x128xf32> to vector<4x128xf32>
    %18 = arith.addf %16, %17 : vector<4x128xf32>
    %cst_13 = arith.constant 0.000000e+00 : f32
    %19 = vector.broadcast %cst_13 : f32 to vector<4x128xf32>
    %20 = arith.maximumf %18, %19 : vector<4x128xf32>
    %cst_14 = arith.constant dense<0.000000e+00> : vector<4x128xf32>
    %21 = tpu.matmul %20, %5, %cst_14 {dimension_numbers = #tpu.dot_dimension_numbers<[1], [0], [0], [1], [0, 0, 1, 1], [], []>} : vector<4x128xf32>, vector<128x128xf32>, vector<4x128xf32> -> vector<4x128xf32>
    %22 = vector.broadcast %9 : vector<1x128xf32> to vector<4x128xf32>
    %23 = arith.addf %21, %22 : vector<4x128xf32>
    %cst_15 = arith.constant 0.000000e+00 : f32
    %24 = vector.broadcast %cst_15 : f32 to vector<4x128xf32>
    %25 = arith.maximumf %23, %24 : vector<4x128xf32>
    %cst_16 = arith.constant dense<0.000000e+00> : vector<4x128xf32>
    %26 = tpu.matmul %25, %6, %cst_16 {dimension_numbers = #tpu.dot_dimension_numbers<[1], [0], [0], [1], [0, 0, 1, 1], [], []>} : vector<4x128xf32>, vector<128x128xf32>, vector<4x128xf32> -> vector<4x128xf32>
    %27 = vector.broadcast %10 : vector<1x128xf32> to vector<4x128xf32>
    %28 = arith.addf %26, %27 : vector<4x128xf32>
    %c0_17 = arith.constant 0 : index
    %c0_18 = arith.constant 0 : index
    %29 = vector.load %arg6[%c0_17, %c0_18] : memref<4x128xf32, #tpu.memory_space<vmem>>, vector<4x128xf32>
    tpu.vector_store %arg6[%c0_17, %c0_18], %28 {strides = array<i32>} : memref<4x128xf32, #tpu.memory_space<vmem>>, vector<4x128xf32>,
    %c0_19 = arith.constant 0 : index
    %c0_20 = arith.constant 0 : index
    %c0_21 = arith.constant 0 : index
    %30 = vector.load %arg5[%c0_19, %c0_20, %c0_21] : memref<1x4x128xf32, #tpu.memory_space<vmem>>, vector<1x4x128xf32>
    %31 = vector.shape_cast %30 : vector<1x4x128xf32> to vector<4x128xf32>
    %32 = vector.shape_cast %28 : vector<4x128xf32> to vector<1x4x128xf32>
    tpu.vector_store %arg5[%c0_19, %c0_20, %c0_21], %32 {strides = array<i32>} : memref<1x4x128xf32, #tpu.memory_space<vmem>>, vector<1x4x128xf32>,
    return
  }
  func.func @transform_0(%arg0: i32) -> (i32, i32, i32) {
    %c0_i32 = arith.constant 0 : i32
    %c0_i32_0 = arith.constant 0 : i32
    %c0_i32_1 = arith.constant 0 : i32
    return %arg0, %c0_i32, %c0_i32_0 : i32, i32, i32
  }
  func.func @transform_1(%arg0: i32) -> (i32, i32) {
    %c0_i32 = arith.constant 0 : i32
    %c0_i32_0 = arith.constant 0 : i32
    %c0_i32_1 = arith.constant 0 : i32
    return %c0_i32, %c0_i32_0 : i32, i32
  }
  func.func @transform_2(%arg0: i32) -> (i32, i32) {
    %c0_i32 = arith.constant 0 : i32
    %c0_i32_0 = arith.constant 0 : i32
    %c0_i32_1 = arith.constant 0 : i32
    return %c0_i32, %c0_i32_0 : i32, i32
  }
  func.func @transform_3(%arg0: i32) -> (i32, i32) {
    %c0_i32 = arith.constant 0 : i32
    %c0_i32_0 = arith.constant 0 : i32
    %c0_i32_1 = arith.constant 0 : i32
    return %c0_i32, %c0_i32_0 : i32, i32
  }
  func.func @transform_4(%arg0: i32) -> (i32, i32, i32) {
    %c0_i32 = arith.constant 0 : i32
    %c0_i32_0 = arith.constant 0 : i32
    %c0_i32_1 = arith.constant 0 : i32
    return %arg0, %c0_i32, %c0_i32_0 : i32, i32, i32
  }
}

</mosaic_0001>

<llo_original>
// kernel: tpu_custom_call.1
$region0: #{tpu_custom_call.1}
  #allocation0 [shape = 'u32[]', space=smem, size = 0x4, offset = 0x4, fixed_abs, tag = 'smem constant byte address 0x4 - core index']
  #allocation1 [shape = 'u32[144,128]{1,0:T(1,128)}', space=vmem, size = 0x12000, scoped, tag = 'internal scratch']
  #allocation2 [shape = 'f32[4,128]{1,0:T(4,128)}', space=vmem, size = 0x800, scoped, tag = 'scratch operand']
  %s0 = inlined_call_operand.hbm [shape: f32[1,4,16], index: 0, kind: input, shape index: {}]
  %s1 = inlined_call_operand.hbm [shape: f32[400,128], index: 1, kind: input, shape index: {}]
  %s2 = inlined_call_operand.hbm [shape: f32[8,128], index: 2, kind: input, shape index: {}]
  %s3 = inlined_call_operand.vmem [shape: f32[4,128], index: 3, kind: input, shape index: {}]
  %s4 = inlined_call_operand.hbm [shape: f32[1,4,128], index: 4, kind: output, shape index: {}]
  %s5 = sld [smem:[#allocation0]]
  $region42: #{tpu_custom_call.1} parent=0
    _
  %s7 = ssub.s32 1, %s5
  %s8 = scalar_select 0, %s7, %s5
  $region1: #{tpu_custom_call.1} parent=0
    #allocation3 [shape = 'u8[2048]{0}', space=vmem, size = 0x800, scoped, tag = 'input window, operand 0, single buffered']
    #allocation4 [shape = 's32[1]{0}', space=sflag, size = 0x4, scoped, tag = 'scoped memory for tpu_custom_call.1']
    #allocation5 [shape = 's32[1]{0}', space=sflag, size = 0x4, scoped, tag = 'scoped memory for tpu_custom_call.1']
    #allocation6 [shape = 'u8[204800]{0}', space=vmem, size = 0x32000, scoped, tag = 'input window, operand 1, single buffered']
    #allocation7 [shape = 's32[1]{0}', space=sflag, size = 0x4, scoped, tag = 'scoped memory for tpu_custom_call.1']
    #allocation8 [shape = 'u8[4096]{0}', space=vmem, size = 0x1000, scoped, tag = 'input window, operand 2, single buffered']
    #allocation9 [shape = 'u8[2048]{0}', space=vmem, size = 0x800, scoped, tag = 'output window, operand 0, single buffered']
    %9 = vsyncpa [#allocation4], 0
    %10 = vsyncpa [#allocation7], 0
    %11 = vsyncpa [#allocation5], 0
    // Predicated region
    $region2: #{tpu_custom_call.1} parent=1 // pred_check
      _
    $region3: #{tpu_custom_call.1} parent=1 // pred_check_branch
      %13 = sbr.rel (0) target = $region5
    $region4: #{tpu_custom_call.1} parent=1 // pred_region
      %s15 = ssub.s32 64, 64
      %16 = vsyncadd [#allocation4], %s15
      %s18 = sshll.u32 [#allocation3], 4
      %s19 = int_to_ptr.vmem [resolvable:$true] %s18
      %21 = dma.hbm_to_vmem [thread:$0]  %s0, 64, %s19, [#allocation4]
    $region5: #{tpu_custom_call.1} parent=1 // pred_fallthru
      _
    // Predicated region
    $region6: #{tpu_custom_call.1} parent=1 // pred_check
      _
    $region7: #{tpu_custom_call.1} parent=1 // pred_check_branch
      %23 = sbr.rel (0) target = $region9
    $region8: #{tpu_custom_call.1} parent=1 // pred_region
      %s25 = ssub.s32 6400, 6400
      %26 = vsyncadd [#allocation7], %s25
      %s27 = sshll.u32 [#allocation6], 4
      %s28 = int_to_ptr.vmem [resolvable:$true] %s27
      %33 = dma.hbm_to_vmem [thread:$0]  %s1, 6400, %s28, [#allocation7], 128, 128, 8
    $region9: #{tpu_custom_call.1} parent=1 // pred_fallthru
      _
    // Predicated region
    $region10: #{tpu_custom_call.1} parent=1 // pred_check
      _
    $region11: #{tpu_custom_call.1} parent=1 // pred_check_branch
      %35 = sbr.rel (0) target = $region13
    $region12: #{tpu_custom_call.1} parent=1 // pred_region
      %s37 = ssub.s32 128, 128
      %38 = vsyncadd [#allocation7], %s37
      %s40 = sshll.u32 [#allocation8], 4
      %s41 = int_to_ptr.vmem [resolvable:$true] %s40
      %43 = dma.hbm_to_vmem [thread:$0]  %s2, 128, %s41, [#allocation7]
    $region13: #{tpu_custom_call.1} parent=1 // pred_fallthru
      _
    // Predicated region
    $region14: #{tpu_custom_call.1} parent=1 // pred_check
      _
    $region15: #{tpu_custom_call.1} parent=1 // pred_check_branch
      %45 = sbr.rel (0) target = $region17
    $region16: #{tpu_custom_call.1} parent=1 // pred_region
      _
    $region17: #{tpu_custom_call.1} parent=1 // pred_fallthru
      _
    // Predicated region
    $region18: #{tpu_custom_call.1} parent=1 // pred_check
      _
    $region19: #{tpu_custom_call.1} parent=1 // pred_check_branch
      %47 = sbr.rel (0) target = $region21
    $region20: #{tpu_custom_call.1} parent=1 // pred_region
      %48 = dma.done [#allocation4], 64
    $region21: #{tpu_custom_call.1} parent=1 // pred_fallthru
      _
    // Predicated region
    $region22: #{tpu_custom_call.1} parent=1 // pred_check
      _
    $region23: #{tpu_custom_call.1} parent=1 // pred_check_branch
      %50 = sbr.rel (0) target = $region25
    $region24: #{tpu_custom_call.1} parent=1 // pred_region
      %51 = dma.done [#allocation7], 6400
    $region25: #{tpu_custom_call.1} parent=1 // pred_fallthru
      _
    // Predicated region
    $region26: #{tpu_custom_call.1} parent=1 // pred_check
      _
    $region27: #{tpu_custom_call.1} parent=1 // pred_check_branch
      %53 = sbr.rel (0) target = $region29
    $region28: #{tpu_custom_call.1} parent=1 // pred_region
      %54 = dma.done [#allocation7], 128
    $region29: #{tpu_custom_call.1} parent=1 // pred_fallthru
      _
    %p55 = scmp.eq.s32.totalorder 0, 0
    // Predicated region
    $region30: #{tpu_custom_call.1} parent=1 // pred_check
      %p56 = pneg %p55
    $region31: #{tpu_custom_call.1} parent=1 // pred_check_branch
      %58 = sbr.rel (%p56) target = $region33
    $region32: #{tpu_custom_call.1} parent=1 // pred_region
      %v59 = vld [vmem:[%s3] sm:$0xf]
      %60 = vst [vmem:[#allocation2] sm:$0xf] %v59
    $region33: #{tpu_custom_call.1} parent=1 // pred_fallthru
      _
    %v61 = vld [vmem:[#allocation6] sm:$0xff]
    %v62 = vld [vmem:[#allocation6 + $0x8] sm:$0xff]
    %v63 = vld [vmem:[#allocation6 + $0x10] sm:$0xff]
    %v64 = vld [vmem:[#allocation6 + $0x18] sm:$0xff]
    %v65 = vld [vmem:[#allocation6 + $0x20] sm:$0xff]
    %v66 = vld [vmem:[#allocation6 + $0x28] sm:$0xff]
    %v67 = vld [vmem:[#allocation6 + $0x30] sm:$0xff]
    %v68 = vld [vmem:[#allocation6 + $0x38] sm:$0xff]
    %v69 = vld [vmem:[#allocation6 + $0x40] sm:$0xff]
    %v70 = vld [vmem:[#allocation6 + $0x48] sm:$0xff]
    %v71 = vld [vmem:[#allocation6 + $0x50] sm:$0xff]
    %v72 = vld [vmem:[#allocation6 + $0x58] sm:$0xff]
    %v73 = vld [vmem:[#allocation6 + $0x60] sm:$0xff]
    %v74 = vld [vmem:[#allocation6 + $0x68] sm:$0xff]
    %v75 = vld [vmem:[#allocation6 + $0x70] sm:$0xff]
    %v76 = vld [vmem:[#allocation6 + $0x78] sm:$0xff]
    %v77 = vld [vmem:[#allocation6 + $0x80] sm:$0xff]
    %v78 = vld [vmem:[#allocation6 + $0x88] sm:$0xff]
    %v79 = vld [vmem:[#allocation6 + $0x90] sm:$0xff]
    %v80 = vld [vmem:[#allocation6 + $0x98] sm:$0xff]
    %v81 = vld [vmem:[#allocation6 + $0xa0] sm:$0xff]
    %v82 = vld [vmem:[#allocation6 + $0xa8] sm:$0xff]
    %v83 = vld [vmem:[#allocation6 + $0xb0] sm:$0xff]
    %v84 = vld [vmem:[#allocation6 + $0xb8] sm:$0xff]
    %v85 = vld [vmem:[#allocation6 + $0xc0] sm:$0xff]
    %v86 = vld [vmem:[#allocation6 + $0xc8] sm:$0xff]
    %v87 = vld [vmem:[#allocation6 + $0xd0] sm:$0xff]
    %v88 = vld [vmem:[#allocation6 + $0xd8] sm:$0xff]
    %v89 = vld [vmem:[#allocation6 + $0xe0] sm:$0xff]
    %v90 = vld [vmem:[#allocation6 + $0xe8] sm:$0xff]
    %v91 = vld [vmem:[#allocation6 + $0xf0] sm:$0xff]
    %v92 = vld [vmem:[#allocation6 + $0xf8] sm:$0xff]
    %v93 = vld [vmem:[#allocation6 + $0x100] sm:$0xff]
    %v94 = vld [vmem:[#allocation6 + $0x108] sm:$0xff]
    %v95 = vld [vmem:[#allocation6 + $0x110] sm:$0xff]
    %v96 = vld [vmem:[#allocation6 + $0x118] sm:$0xff]
    %v97 = vld [vmem:[#allocation6 + $0x120] sm:$0xff]
    %v98 = vld [vmem:[#allocation6 + $0x128] sm:$0xff]
    %v99 = vld [vmem:[#allocation6 + $0x130] sm:$0xff]
    %v100 = vld [vmem:[#allocation6 + $0x138] sm:$0xff]
    %v101 = vld [vmem:[#allocation6 + $0x140] sm:$0xff]
    %v102 = vld [vmem:[#allocation6 + $0x148] sm:$0xff]
    %v103 = vld [vmem:[#allocation6 + $0x150] sm:$0xff]
    %v104 = vld [vmem:[#allocation6 + $0x158] sm:$0xff]
    %v105 = vld [vmem:[#allocation6 + $0x160] sm:$0xff]
    %v106 = vld [vmem:[#allocation6 + $0x168] sm:$0xff]
    %v107 = vld [vmem:[#allocation6 + $0x170] sm:$0xff]
    %v108 = vld [vmem:[#allocation6 + $0x178] sm:$0xff]
    %v109 = vld [vmem:[#allocation6 + $0x180] sm:$0xff]
    %v110 = vld [vmem:[#allocation6 + $0x188] sm:$0xff]
    %v111 = vld [vmem:[#allocation8] sm:$0xff]
    %v112 = vld [vmem:[#allocation3] sm:$0xf]
    %v113 = vld [vmem:[#allocation2] sm:$0xf]
    %114 = vmatprep.subr.mxu0 0.0
    %115 = vmatpush1.msra.mxu0 %v63
    %116 = vmatprep.subr.mxu0 0.0
    %117 = vmatpush1.msra.mxu0 %v64
    %118 = vmatprep.subr.mxu0 0.0
    %119 = vmatpush1.msra.mxu0 %v65
    %120 = vmatprep.subr.mxu0 0.0
    %121 = vmatpush1.msra.mxu0 %v66
    %122 = vmatprep.subr.mxu0 0.0
    %123 = vmatpush1.msra.mxu0 %v67
    %124 = vmatprep.subr.mxu0 0.0
    %125 = vmatpush1.msra.mxu0 %v68
    %126 = vmatprep.subr.mxu0 0.0
    %127 = vmatpush1.msra.mxu0 %v69
    %128 = vmatprep.subr.mxu0 0.0
    %129 = vmatpush1.msra.mxu0 %v70
    %130 = vmatprep.subr.mxu0 0.0
    %131 = vmatpush1.msra.mxu0 %v71
    %132 = vmatprep.subr.mxu0 0.0
    %133 = vmatpush1.msra.mxu0 %v72
    %134 = vmatprep.subr.mxu0 0.0
    %135 = vmatpush1.msra.mxu0 %v73
    %136 = vmatprep.subr.mxu0 0.0
    %137 = vmatpush1.msra.mxu0 %v74
    %138 = vmatprep.subr.mxu0 0.0
    %139 = vmatpush1.msra.mxu0 %v75
    %140 = vmatprep.subr.mxu0 0.0
    %141 = vmatpush1.msra.mxu0 %v76
    %142 = vmatprep.subr.mxu0 0.0
    %143 = vmatpush1.msra.mxu0 %v77
    %144 = vmatprep.subr.mxu0 0.0
    %145 = vmatpush1.msra.mxu0 %v78
    %146 = vmatprep.subr.mxu0 0.0
    %147 = vmatpush1.msra.mxu0 0.0
    %148 = vmatprep.subr.mxu0 0.0
    %149 = vmatpush1.msra.mxu0 0.0
    %150 = vmatprep.subr.mxu0 0.0
    %151 = vmatpush1.msra.mxu0 0.0
    %152 = vmatprep.subr.mxu0 0.0
    %153 = vmatpush1.msra.mxu0 0.0
    %154 = vmatprep.subr.mxu0 0.0
    %155 = vmatpush1.msra.mxu0 0.0
    %156 = vmatprep.subr.mxu0 0.0
    %157 = vmatpush1.msra.mxu0 0.0
    %158 = vmatprep.subr.mxu0 0.0
    %159 = vmatpush1.msra.mxu0 0.0
    %160 = vmatprep.subr.mxu0 0.0
    %161 = vmatpush1.msra.mxu0 0.0
    %162 = vmatprep.subr.mxu0 0.0
    %163 = vmatpush1.msra.mxu0 0.0
    %164 = vmatprep.subr.mxu0 0.0
    %165 = vmatpush1.msra.mxu0 0.0
    %166 = vmatprep.subr.mxu0 0.0
    %167 = vmatpush1.msra.mxu0 0.0
    %168 = vmatprep.subr.mxu0 0.0
    %169 = vmatpush1.msra.mxu0 0.0
    %170 = vmatprep.subr.mxu0 0.0
    %171 = vmatpush1.msra.mxu0 0.0
    %172 = vmatprep.subr.mxu0 0.0
    %173 = vmatpush1.msra.mxu0 0.0
    %174 = vmatprep.subr.mxu0 0.0
    %175 = vmatpush1.msra.mxu0 0.0
    %176 = vmatprep.subr.mxu0 0.0
    %177 = vmatpush1.msra.mxu0 0.0
    %178 = vmatprep.mubr.f32.mxu0 0.0
    %179 = vmatmul.mubr.f32.gmra.mrb[0].mxu0 %v113
    %v180 = vpop.f32.mrb[0].mxu0
    %v181 = vadd.f32 0.0, %v180
    %v182 = vpop.f32.mrb[0].mxu0
    %183 = vdwg.mxu0
    %vm184 = vcmask 130048
    %v186 = vsel %vm184, %v112, 0
    %188 = vmatprep.subr.mxu0 0.0
    %189 = vmatpush1.msra.mxu0 %v61
    %190 = vmatprep.subr.mxu0 0.0
    %191 = vmatpush1.msra.mxu0 %v62
    %192 = vmatprep.subr.mxu0 0.0
    %193 = vmatpush1.msra.mxu0 0.0
    %194 = vmatprep.subr.mxu0 0.0
    %195 = vmatpush1.msra.mxu0 0.0
    %196 = vmatprep.subr.mxu0 0.0
    %197 = vmatpush1.msra.mxu0 0.0
    %198 = vmatprep.subr.mxu0 0.0
    %199 = vmatpush1.msra.mxu0 0.0
    %200 = vmatprep.subr.mxu0 0.0
    %201 = vmatpush1.msra.mxu0 0.0
    %202 = vmatprep.subr.mxu0 0.0
    %203 = vmatpush1.msra.mxu0 0.0
    %204 = vmatprep.subr.mxu0 0.0
    %205 = vmatpush1.msra.mxu0 0.0
    %206 = vmatprep.subr.mxu0 0.0
    %207 = vmatpush1.msra.mxu0 0.0
    %208 = vmatprep.subr.mxu0 0.0
    %209 = vmatpush1.msra.mxu0 0.0
    %210 = vmatprep.subr.mxu0 0.0
    %211 = vmatpush1.msra.mxu0 0.0
    %212 = vmatprep.subr.mxu0 0.0
    %213 = vmatpush1.msra.mxu0 0.0
    %214 = vmatprep.subr.mxu0 0.0
    %215 = vmatpush1.msra.mxu0 0.0
    %216 = vmatprep.subr.mxu0 0.0
    %217 = vmatpush1.msra.mxu0 0.0
    %218 = vmatprep.subr.mxu0 0.0
    %219 = vmatpush1.msra.mxu0 0.0
    %220 = vmatprep.subr.mxu0 0.0
    %221 = vmatpush1.msra.mxu0 0.0
    %222 = vmatprep.subr.mxu0 0.0
    %223 = vmatpush1.msra.mxu0 0.0
    %224 = vmatprep.subr.mxu0 0.0
    %225 = vmatpush1.msra.mxu0 0.0
    %226 = vmatprep.subr.mxu0 0.0
    %227 = vmatpush1.msra.mxu0 0.0
    %228 = vmatprep.subr.mxu0 0.0
    %229 = vmatpush1.msra.mxu0 0.0
    %230 = vmatprep.subr.mxu0 0.0
    %231 = vmatpush1.msra.mxu0 0.0
    %232 = vmatprep.subr.mxu0 0.0
    %233 = vmatpush1.msra.mxu0 0.0
    %234 = vmatprep.subr.mxu0 0.0
    %235 = vmatpush1.msra.mxu0 0.0
    %236 = vmatprep.subr.mxu0 0.0
    %237 = vmatpush1.msra.mxu0 0.0
    %238 = vmatprep.subr.mxu0 0.0
    %239 = vmatpush1.msra.mxu0 0.0
    %240 = vmatprep.subr.mxu0 0.0
    %241 = vmatpush1.msra.mxu0 0.0
    %242 = vmatprep.subr.mxu0 0.0
    %243 = vmatpush1.msra.mxu0 0.0
    %244 = vmatprep.subr.mxu0 0.0
    %245 = vmatpush1.msra.mxu0 0.0
    %246 = vmatprep.subr.mxu0 0.0
    %247 = vmatpush1.msra.mxu0 0.0
    %248 = vmatprep.subr.mxu0 0.0
    %249 = vmatpush1.msra.mxu0 0.0
    %250 = vmatprep.subr.mxu0 0.0
    %251 = vmatpush1.msra.mxu0 0.0
    %252 = vmatprep.mubr.f32.mxu0 0.0
    %253 = vmatmul.mubr.f32.gmra.mrb[0].mxu0 %v186
    %v254 = vpop.f32.mrb[0].mxu0
    %v255 = vadd.f32 %v181, %v254
    %v256 = vpop.f32.mrb[0].mxu0
    %257 = vdwg.mxu0
    %v258 = vlaneseq
    %v259 = vshrl.u32 %v258, 7
    %v260 = vsub.s32 0, %v259
    %v261 = vrot.slane %v111, %v260
    %v262 = vadd.f32 %v255, %v261
    %v263 = vmax.f32 %v262, 0.0
    %v264 = vlaneseq
    %v265 = vshrl.u32 %v264, 7
    %v266 = vsub.s32 1, %v265
    %v267 = vrot.slane %v111, %v266
    %268 = vmatprep.subr.mxu0 0.0
    %269 = vmatpush1.msra.mxu0 %v79
    %270 = vmatprep.subr.mxu0 0.0
    %271 = vmatpush1.msra.mxu0 %v80
    %272 = vmatprep.subr.mxu0 0.0
    %273 = vmatpush1.msra.mxu0 %v81
    %274 = vmatprep.subr.mxu0 0.0
    %275 = vmatpush1.msra.mxu0 %v82
    %276 = vmatprep.subr.mxu0 0.0
    %277 = vmatpush1.msra.mxu0 %v83
    %278 = vmatprep.subr.mxu0 0.0
    %279 = vmatpush1.msra.mxu0 %v84
    %280 = vmatprep.subr.mxu0 0.0
    %281 = vmatpush1.msra.mxu0 %v85
    %282 = vmatprep.subr.mxu0 0.0
    %283 = vmatpush1.msra.mxu0 %v86
    %284 = vmatprep.subr.mxu0 0.0
    %285 = vmatpush1.msra.mxu0 %v87
    %286 = vmatprep.subr.mxu0 0.0
    %287 = vmatpush1.msra.mxu0 %v88
    %288 = vmatprep.subr.mxu0 0.0
    %289 = vmatpush1.msra.mxu0 %v89
    %290 = vmatprep.subr.mxu0 0.0
    %291 = vmatpush1.msra.mxu0 %v90
    %292 = vmatprep.subr.mxu0 0.0
    %293 = vmatpush1.msra.mxu0 %v91
    %294 = vmatprep.subr.mxu0 0.0
    %295 = vmatpush1.msra.mxu0 %v92
    %296 = vmatprep.subr.mxu0 0.0
    %297 = vmatpush1.msra.mxu0 %v93
    %298 = vmatprep.subr.mxu0 0.0
    %299 = vmatpush1.msra.mxu0 %v94
    %300 = vmatprep.subr.mxu0 0.0
    %301 = vmatpush1.msra.mxu0 0.0
    %302 = vmatprep.subr.mxu0 0.0
    %303 = vmatpush1.msra.mxu0 0.0
    %304 = vmatprep.subr.mxu0 0.0
    %305 = vmatpush1.msra.mxu0 0.0
    %306 = vmatprep.subr.mxu0 0.0
    %307 = vmatpush1.msra.mxu0 0.0
    %308 = vmatprep.subr.mxu0 0.0
    %309 = vmatpush1.msra.mxu0 0.0
    %310 = vmatprep.subr.mxu0 0.0
    %311 = vmatpush1.msra.mxu0 0.0
    %312 = vmatprep.subr.mxu0 0.0
    %313 = vmatpush1.msra.mxu0 0.0
    %314 = vmatprep.subr.mxu0 0.0
    %315 = vmatpush1.msra.mxu0 0.0
    %316 = vmatprep.subr.mxu0 0.0
    %317 = vmatpush1.msra.mxu0 0.0
    %318 = vmatprep.subr.mxu0 0.0
    %319 = vmatpush1.msra.mxu0 0.0
    %320 = vmatprep.subr.mxu0 0.0
    %321 = vmatpush1.msra.mxu0 0.0
    %322 = vmatprep.subr.mxu0 0.0
    %323 = vmatpush1.msra.mxu0 0.0
    %324 = vmatprep.subr.mxu0 0.0
    %325 = vmatpush1.msra.mxu0 0.0
    %326 = vmatprep.subr.mxu0 0.0
    %327 = vmatpush1.msra.mxu0 0.0
    %328 = vmatprep.subr.mxu0 0.0
    %329 = vmatpush1.msra.mxu0 0.0
    %330 = vmatprep.subr.mxu0 0.0
    %331 = vmatpush1.msra.mxu0 0.0
    %332 = vmatprep.mubr.f32.mxu0 0.0
    %333 = vmatmul.mubr.f32.gmra.mrb[0].mxu0 %v263
    %v334 = vpop.f32.mrb[0].mxu0
    %v335 = vadd.f32 %v267, %v334
    %v336 = vpop.f32.mrb[0].mxu0
    %337 = vdwg.mxu0
    %v338 = vmax.f32 %v335, 0.0
    %v339 = vlaneseq
    %v340 = vshrl.u32 %v339, 7
    %v341 = vsub.s32 2, %v340
    %v342 = vrot.slane %v111, %v341
    %343 = vmatprep.subr.mxu0 0.0
    %344 = vmatpush1.msra.mxu0 %v95
    %345 = vmatprep.subr.mxu0 0.0
    %346 = vmatpush1.msra.mxu0 %v96
    %347 = vmatprep.subr.mxu0 0.0
    %348 = vmatpush1.msra.mxu0 %v97
    %349 = vmatprep.subr.mxu0 0.0
    %350 = vmatpush1.msra.mxu0 %v98
    %351 = vmatprep.subr.mxu0 0.0
    %352 = vmatpush1.msra.mxu0 %v99
    %353 = vmatprep.subr.mxu0 0.0
    %354 = vmatpush1.msra.mxu0 %v100
    %355 = vmatprep.subr.mxu0 0.0
    %356 = vmatpush1.msra.mxu0 %v101
    %357 = vmatprep.subr.mxu0 0.0
    %358 = vmatpush1.msra.mxu0 %v102
    %359 = vmatprep.subr.mxu0 0.0
    %360 = vmatpush1.msra.mxu0 %v103
    %361 = vmatprep.subr.mxu0 0.0
    %362 = vmatpush1.msra.mxu0 %v104
    %363 = vmatprep.subr.mxu0 0.0
    %364 = vmatpush1.msra.mxu0 %v105
    %365 = vmatprep.subr.mxu0 0.0
    %366 = vmatpush1.msra.mxu0 %v106
    %367 = vmatprep.subr.mxu0 0.0
    %368 = vmatpush1.msra.mxu0 %v107
    %369 = vmatprep.subr.mxu0 0.0
    %370 = vmatpush1.msra.mxu0 %v108
    %371 = vmatprep.subr.mxu0 0.0
    %372 = vmatpush1.msra.mxu0 %v109
    %373 = vmatprep.subr.mxu0 0.0
    %374 = vmatpush1.msra.mxu0 %v110
    %375 = vmatprep.subr.mxu0 0.0
    %376 = vmatpush1.msra.mxu0 0.0
    %377 = vmatprep.subr.mxu0 0.0
    %378 = vmatpush1.msra.mxu0 0.0
    %379 = vmatprep.subr.mxu0 0.0
    %380 = vmatpush1.msra.mxu0 0.0
    %381 = vmatprep.subr.mxu0 0.0
    %382 = vmatpush1.msra.mxu0 0.0
    %383 = vmatprep.subr.mxu0 0.0
    %384 = vmatpush1.msra.mxu0 0.0
    %385 = vmatprep.subr.mxu0 0.0
    %386 = vmatpush1.msra.mxu0 0.0
    %387 = vmatprep.subr.mxu0 0.0
    %388 = vmatpush1.msra.mxu0 0.0
    %389 = vmatprep.subr.mxu0 0.0
    %390 = vmatpush1.msra.mxu0 0.0
    %391 = vmatprep.subr.mxu0 0.0
    %392 = vmatpush1.msra.mxu0 0.0
    %393 = vmatprep.subr.mxu0 0.0
    %394 = vmatpush1.msra.mxu0 0.0
    %395 = vmatprep.subr.mxu0 0.0
    %396 = vmatpush1.msra.mxu0 0.0
    %397 = vmatprep.subr.mxu0 0.0
    %398 = vmatpush1.msra.mxu0 0.0
    %399 = vmatprep.subr.mxu0 0.0
    %400 = vmatpush1.msra.mxu0 0.0
    %401 = vmatprep.subr.mxu0 0.0
    %402 = vmatpush1.msra.mxu0 0.0
    %403 = vmatprep.subr.mxu0 0.0
    %404 = vmatpush1.msra.mxu0 0.0
    %405 = vmatprep.subr.mxu0 0.0
    %406 = vmatpush1.msra.mxu0 0.0
    %407 = vmatprep.mubr.f32.mxu0 0.0
    %408 = vmatmul.mubr.f32.gmra.mrb[0].mxu0 %v338
    %v409 = vpop.f32.mrb[0].mxu0
    %v410 = vadd.f32 %v342, %v409
    %v411 = vpop.f32.mrb[0].mxu0
    %412 = vdwg.mxu0
    %413 = vst [vmem:[#allocation2] sm:$0xf] %v410
    %414 = vst [vmem:[#allocation9] sm:$0xf] %v410
    // Predicated region
    $region34: #{tpu_custom_call.1} parent=1 // pred_check
      _
    $region35: #{tpu_custom_call.1} parent=1 // pred_check_branch
      %416 = sbr.rel (0) target = $region37
    $region36: #{tpu_custom_call.1} parent=1 // pred_region
      %s418 = ssub.s32 64, 64
      %419 = vsyncadd [#allocation5], %s418
      %s421 = sshll.u32 [#allocation9], 4
      %s422 = int_to_ptr.vmem [resolvable:$true] %s421
      %424 = dma.vmem_to_hbm [thread:$0]  %s422, 64, %s4, [#allocation5]
    $region37: #{tpu_custom_call.1} parent=1 // pred_fallthru
      _
    // Predicated region
    $region38: #{tpu_custom_call.1} parent=1 // pred_check
      _
    $region39: #{tpu_custom_call.1} parent=1 // pred_check_branch
      %426 = sbr.rel (0) target = $region41
    $region40: #{tpu_custom_call.1} parent=1 // pred_region
      %427 = dma.done [#allocation5], 64
    $region41: #{tpu_custom_call.1} parent=1 // pred_fallthru
      _
    %428 = vsyncpa [#allocation4], 1
    %429 = vsyncpa [#allocation7], 1
    %430 = vsyncpa [#allocation5], 1

</llo_original>
